<compile_context>
chip_gen: v6e
topology: v6e:2x2x1
jax: 0.10.0
libtpu: 0.0.40
codegen_flags: <defaults>
</compile_context>

<pallas_src>
import functools

import jax
import jax.numpy as jnp
from jax.experimental import pallas as pl
from jax.experimental.pallas import tpu as pltpu


def _round_up(x, m):
    return (x + m - 1) // m * m


def _mlp_kernel(x_ref, w1_ref, b1_ref, w2_ref, b2_ref,
                w3_ref, b3_ref, w4_ref, b4_ref, o_ref):
    """Fused 4-layer MLP on one batch tile.

    x_ref : (bb, in_dim)  compute dtype (bf16 by default)
    w1..w3: (K, N)        compute dtype
    b1..b3: (1, N)        float32
    w4_ref: (1, h2)       compute dtype (output layer stored as a row)
    b4_ref: (1,)          float32 scalar in SMEM
    o_ref : (1, bb)       float32, lane-dense logits row
    """
    cdt = w1_ref.dtype  # compute dtype for MXU inputs (bf16 or f32)

    # Layer 1: in_dim -> h0, ReLU (MXU, f32 accumulate; bias/ReLU in f32).
    h = jnp.dot(x_ref[...], w1_ref[...], preferred_element_type=jnp.float32)
    h = jnp.maximum(h + b1_ref[...], 0.0)
    # Layer 2: h0 -> h1, ReLU
    h = jnp.dot(h.astype(cdt), w2_ref[...], preferred_element_type=jnp.float32)
    h = jnp.maximum(h + b2_ref[...], 0.0)
    # Layer 3: h1 -> h2, ReLU
    h = jnp.dot(h.astype(cdt), w3_ref[...], preferred_element_type=jnp.float32)
    h = jnp.maximum(h + b3_ref[...], 0.0)
    # Layer 4: h2 -> 1, no activation.  Computed as
    #   (1, h2) . (bb, h2)^T -> (1, bb)
    # so the result is already a lane-dense row (unmasked full-lane store).
    logits = jax.lax.dot_general(
        w4_ref[...], h.astype(cdt),
        dimension_numbers=(((1,), (1,)), ((), ())),
        preferred_element_type=jnp.float32)
    o_ref[...] = (logits + b4_ref[0]).astype(o_ref.dtype)


@functools.partial(jax.jit, static_argnames=("block_b", "use_bf16"))
def mlp_forward(x, params, block_b=512, use_bf16=True):
    """x: [B, in_dim] float32.  Returns [B] float32 (logits.squeeze(-1))."""
    (w1, b1), (w2, b2), (w3, b3), (w4, b4) = params
    B, in_dim = x.shape
    h0 = w1.shape[1]
    h1 = w2.shape[1]
    h2 = w3.shape[1]

    # --- tile-size selection ------------------------------------------------
    # Batch tile: multiple of 128 (so the lane-dense output block stays
    # 128-aligned), capped by the (rounded-up) batch size.
    bb = min(_round_up(block_b, 128), _round_up(B, 128))
    # Keep >= 2 grid steps when possible so v7x megacore can use both TCs.
    if _round_up(B, bb) == bb and bb >= 256 and bb % 256 == 0:
        bb //= 2
    B_pad = _round_up(B, bb)
    n_blocks = B_pad // bb

    # --- operand preparation ------------------------------------------------
    cdt = jnp.bfloat16 if use_bf16 else jnp.float32
    xp = x if B_pad == B else jnp.pad(x, ((0, B_pad - B), (0, 0)))
    xp = xp.astype(cdt)
    w1c = w1.astype(cdt)
    w2c = w2.astype(cdt)
    w3c = w3.astype(cdt)
    w4r = w4.reshape(1, h2).astype(cdt)          # output layer as a row
    # Biases as (1, H) rows, kept in f32 (v5e has no bf16 VPU path).
    b1r = b1.reshape(1, h0).astype(jnp.float32)
    b2r = b2.reshape(1, h1).astype(jnp.float32)
    b3r = b3.reshape(1, h2).astype(jnp.float32)
    b4s = b4.reshape(1).astype(jnp.float32)      # scalar -> SMEM

    def xmap(i):
        return (i, 0)

    def full(i):
        return (0, 0)

    def omap(i):
        return (0, i)

    out = pl.pallas_call(
        _mlp_kernel,
        out_shape=jax.ShapeDtypeStruct((1, B_pad), jnp.float32),
        grid_spec=pltpu.PrefetchScalarGridSpec(
            num_scalar_prefetch=0,
            grid=(n_blocks,),
            in_specs=[
                pl.BlockSpec((bb, in_dim), xmap),   # x tile
                pl.BlockSpec((in_dim, h0), full),   # W1
                pl.BlockSpec((1, h0), full),        # b1
                pl.BlockSpec((h0, h1), full),       # W2
                pl.BlockSpec((1, h1), full),        # b2
                pl.BlockSpec((h1, h2), full),       # W3
                pl.BlockSpec((1, h2), full),        # b3
                pl.BlockSpec((1, h2), full),        # W4 (row)
                pl.BlockSpec(memory_space=pltpu.MemorySpace.SMEM),  # b4 scalar
            ],
            out_specs=pl.BlockSpec((1, bb), omap),  # lane-dense logits row
        ),
        compiler_params=pltpu.CompilerParams(
            dimension_semantics=("parallel",)),
    )(xp, w1c, b1r, w2c, b2r, w3c, b3r, w4r, b4s)

    return out[0, :B]  # drop padding, == logits.squeeze(-1)


def init_mlp_params(key, in_dim, hidden_dims):
    """Deterministic init mimicking torch.nn.Linear (U[-1/sqrt(fan_in), +])."""
    dims = [in_dim] + list(hidden_dims) + [1]
    params = []
    for i in range(len(dims) - 1):
        fan_in, fan_out = dims[i], dims[i + 1]
        key, kw, kb = jax.random.split(key, 3)
        bound = 1.0 / (fan_in ** 0.5)
        w = jax.random.uniform(kw, (fan_in, fan_out), jnp.float32,
                               minval=-bound, maxval=bound)
        b = jax.random.uniform(kb, (fan_out,), jnp.float32,
                               minval=-bound, maxval=bound)
        params.append((w, b))
    return tuple(params)


def mlp_reference(x, params):
    """Pure-JAX f32 reference of the PyTorch forward (eval mode)."""
    (w1, b1), (w2, b2), (w3, b3), (w4, b4) = params
    h = jnp.maximum(x @ w1 + b1, 0.0)
    h = jnp.maximum(h @ w2 + b2, 0.0)
    h = jnp.maximum(h @ w3 + b3, 0.0)
    h = h @ w4 + b4
    return h[:, 0]


if __name__ == "__main__":
    key = jax.random.PRNGKey(0)
    in_dim = 32
    hidden_dims = [64, 64, 32]

    kx, kx2, kp = jax.random.split(key, 3)
    params = init_mlp_params(kp, in_dim, hidden_dims)

    # Small case (single padded tile).
    B = 8
    x = jax.random.normal(kx, (B, in_dim), jnp.float32)
    out = jax.block_until_ready(mlp_forward(x, params))
    ref = mlp_reference(x, params)
    assert out.shape == (B,), out.shape
    assert jnp.allclose(out, ref, atol=5e-2, rtol=5e-2), (out, ref)

    # Non-divisible batch exercising padding + multi-step grid.
    B2 = 300
    x2 = jax.random.normal(kx2, (B2, in_dim), jnp.float32)
    out2 = jax.block_until_ready(mlp_forward(x2, params, block_b=128))
    ref2 = mlp_reference(x2, params)
    assert out2.shape == (B2,), out2.shape
    assert jnp.allclose(out2, ref2, atol=5e-2, rtol=5e-2)

    print("KERNEL_OK")
</pallas_src>

<mosaic_0001>
module attributes {stable_mosaic.version = 11 : i64} {
  func.func @_mlp_kernel(%arg0: i32, %arg1: memref<128x32xbf16, #tpu.memory_space<vmem>>, %arg2: memref<32x64xbf16, #tpu.memory_space<vmem>>, %arg3: memref<1x64xf32, #tpu.memory_space<vmem>>, %arg4: memref<64x64xbf16, #tpu.memory_space<vmem>>, %arg5: memref<1x64xf32, #tpu.memory_space<vmem>>, %arg6: memref<64x32xbf16, #tpu.memory_space<vmem>>, %arg7: memref<1x32xf32, #tpu.memory_space<vmem>>, %arg8: memref<1x32xbf16, #tpu.memory_space<vmem>>, %arg9: memref<1xf32, #tpu.memory_space<smem>>, %arg10: memref<1x128xf32, #tpu.memory_space<vmem>>) attributes {dimension_semantics = [#tpu.dimension_semantics<parallel>], iteration_bounds = array<i64: 1>, scalar_prefetch = 0 : i64, scratch_operands = 0 : i64, tpu.core_type = #tpu.core_type<tc>, window_params = [{transform_indices = @transform_0, window_bounds = array<i64: 128, 32>}, {pipeline_mode = #tpu.pipeline_mode<synchronous>, transform_indices = @transform_1, window_bounds = array<i64: 32, 64>}, {pipeline_mode = #tpu.pipeline_mode<synchronous>, transform_indices = @transform_2, window_bounds = array<i64: 1, 64>}, {pipeline_mode = #tpu.pipeline_mode<synchronous>, transform_indices = @transform_3, window_bounds = array<i64: 64, 64>}, {pipeline_mode = #tpu.pipeline_mode<synchronous>, transform_indices = @transform_4, window_bounds = array<i64: 1, 64>}, {pipeline_mode = #tpu.pipeline_mode<synchronous>, transform_indices = @transform_5, window_bounds = array<i64: 64, 32>}, {pipeline_mode = #tpu.pipeline_mode<synchronous>, transform_indices = @transform_6, window_bounds = array<i64: 1, 32>}, {pipeline_mode = #tpu.pipeline_mode<synchronous>, transform_indices = @transform_7, window_bounds = array<i64: 1, 32>}, {transform_indices = @transform_8, window_bounds = array<i64: 1>}, {transform_indices = @transform_9, window_bounds = array<i64: 1, 128>}]} {
    %c0 = arith.constant 0 : index
    %c0_0 = arith.constant 0 : index
    %0 = vector.load %arg1[%c0, %c0_0] : memref<128x32xbf16, #tpu.memory_space<vmem>>, vector<128x32xbf16>
    %c0_1 = arith.constant 0 : index
    %c0_2 = arith.constant 0 : index
    %1 = vector.load %arg2[%c0_1, %c0_2] : memref<32x64xbf16, #tpu.memory_space<vmem>>, vector<32x64xbf16>
    %cst = arith.constant dense<0.000000e+00> : vector<128x64xf32>
    %2 = tpu.matmul %0, %1, %cst {dimension_numbers = #tpu.dot_dimension_numbers<[1], [0], [0], [1], [0, 0, 1, 1], [], []>} : vector<128x32xbf16>, vector<32x64xbf16>, vector<128x64xf32> -> vector<128x64xf32>
    %c0_3 = arith.constant 0 : index
    %c0_4 = arith.constant 0 : index
    %3 = vector.load %arg3[%c0_3, %c0_4] : memref<1x64xf32, #tpu.memory_space<vmem>>, vector<1x64xf32>
    %4 = vector.broadcast %3 : vector<1x64xf32> to vector<128x64xf32>
    %5 = arith.addf %2, %4 : vector<128x64xf32>
    %cst_5 = arith.constant 0.000000e+00 : f32
    %6 = vector.broadcast %cst_5 : f32 to vector<128x64xf32>
    %7 = arith.maximumf %5, %6 : vector<128x64xf32>
    %8 = arith.truncf %7 : vector<128x64xf32> to vector<128x64xbf16>
    %c0_6 = arith.constant 0 : index
    %c0_7 = arith.constant 0 : index
    %9 = vector.load %arg4[%c0_6, %c0_7] : memref<64x64xbf16, #tpu.memory_space<vmem>>, vector<64x64xbf16>
    %cst_8 = arith.constant dense<0.000000e+00> : vector<128x64xf32>
    %10 = tpu.matmul %8, %9, %cst_8 {dimension_numbers = #tpu.dot_dimension_numbers<[1], [0], [0], [1], [0, 0, 1, 1], [], []>} : vector<128x64xbf16>, vector<64x64xbf16>, vector<128x64xf32> -> vector<128x64xf32>
    %c0_9 = arith.constant 0 : index
    %c0_10 = arith.constant 0 : index
    %11 = vector.load %arg5[%c0_9, %c0_10] : memref<1x64xf32, #tpu.memory_space<vmem>>, vector<1x64xf32>
    %12 = vector.broadcast %11 : vector<1x64xf32> to vector<128x64xf32>
    %13 = arith.addf %10, %12 : vector<128x64xf32>
    %cst_11 = arith.constant 0.000000e+00 : f32
    %14 = vector.broadcast %cst_11 : f32 to vector<128x64xf32>
    %15 = arith.maximumf %13, %14 : vector<128x64xf32>
    %16 = arith.truncf %15 : vector<128x64xf32> to vector<128x64xbf16>
    %c0_12 = arith.constant 0 : index
    %c0_13 = arith.constant 0 : index
    %17 = vector.load %arg6[%c0_12, %c0_13] : memref<64x32xbf16, #tpu.memory_space<vmem>>, vector<64x32xbf16>
    %cst_14 = arith.constant dense<0.000000e+00> : vector<128x32xf32>
    %18 = tpu.matmul %16, %17, %cst_14 {dimension_numbers = #tpu.dot_dimension_numbers<[1], [0], [0], [1], [0, 0, 1, 1], [], []>} : vector<128x64xbf16>, vector<64x32xbf16>, vector<128x32xf32> -> vector<128x32xf32>
    %c0_15 = arith.constant 0 : index
    %c0_16 = arith.constant 0 : index
    %19 = vector.load %arg7[%c0_15, %c0_16] : memref<1x32xf32, #tpu.memory_space<vmem>>, vector<1x32xf32>
    %20 = vector.broadcast %19 : vector<1x32xf32> to vector<128x32xf32>
    %21 = arith.addf %18, %20 : vector<128x32xf32>
    %cst_17 = arith.constant 0.000000e+00 : f32
    %22 = vector.broadcast %cst_17 : f32 to vector<128x32xf32>
    %23 = arith.maximumf %21, %22 : vector<128x32xf32>
    %c0_18 = arith.constant 0 : index
    %c0_19 = arith.constant 0 : index
    %24 = vector.load %arg8[%c0_18, %c0_19] : memref<1x32xbf16, #tpu.memory_space<vmem>>, vector<1x32xbf16>
    %25 = arith.truncf %23 : vector<128x32xf32> to vector<128x32xbf16>
    %cst_20 = arith.constant dense<0.000000e+00> : vector<1x128xf32>
    %26 = tpu.matmul %24, %25, %cst_20 {dimension_numbers = #tpu.dot_dimension_numbers<[1], [1], [0], [0], [0, 0, 1, 0], [], []>} : vector<1x32xbf16>, vector<128x32xbf16>, vector<1x128xf32> -> vector<1x128xf32>
    %c0_21 = arith.constant 0 : index
    %27 = memref.load %arg9[%c0_21] : memref<1xf32, #tpu.memory_space<smem>>
    %28 = vector.broadcast %27 : f32 to vector<1x128xf32>
    %29 = arith.addf %26, %28 : vector<1x128xf32>
    %c0_22 = arith.constant 0 : index
    %c0_23 = arith.constant 0 : index
    %30 = vector.load %arg10[%c0_22, %c0_23] : memref<1x128xf32, #tpu.memory_space<vmem>>, vector<1x128xf32>
    tpu.vector_store %arg10[%c0_22, %c0_23], %29 {strides = array<i32>} : memref<1x128xf32, #tpu.memory_space<vmem>>, vector<1x128xf32>,
    return
  }
  func.func @transform_0(%arg0: i32) -> (i32, i32) {
    %c0_i32 = arith.constant 0 : i32
    %c0_i32_0 = arith.constant 0 : i32
    return %arg0, %c0_i32 : i32, i32
  }
  func.func @transform_1(%arg0: i32) -> (i32, i32) {
    %c0_i32 = arith.constant 0 : i32
    %c0_i32_0 = arith.constant 0 : i32
    %c0_i32_1 = arith.constant 0 : i32
    return %c0_i32, %c0_i32_0 : i32, i32
  }
  func.func @transform_2(%arg0: i32) -> (i32, i32) {
    %c0_i32 = arith.constant 0 : i32
    %c0_i32_0 = arith.constant 0 : i32
    %c0_i32_1 = arith.constant 0 : i32
    return %c0_i32, %c0_i32_0 : i32, i32
  }
  func.func @transform_3(%arg0: i32) -> (i32, i32) {
    %c0_i32 = arith.constant 0 : i32
    %c0_i32_0 = arith.constant 0 : i32
    %c0_i32_1 = arith.constant 0 : i32
    return %c0_i32, %c0_i32_0 : i32, i32
  }
  func.func @transform_4(%arg0: i32) -> (i32, i32) {
    %c0_i32 = arith.constant 0 : i32
    %c0_i32_0 = arith.constant 0 : i32
    %c0_i32_1 = arith.constant 0 : i32
    return %c0_i32, %c0_i32_0 : i32, i32
  }
  func.func @transform_5(%arg0: i32) -> (i32, i32) {
    %c0_i32 = arith.constant 0 : i32
    %c0_i32_0 = arith.constant 0 : i32
    %c0_i32_1 = arith.constant 0 : i32
    return %c0_i32, %c0_i32_0 : i32, i32
  }
  func.func @transform_6(%arg0: i32) -> (i32, i32) {
    %c0_i32 = arith.constant 0 : i32
    %c0_i32_0 = arith.constant 0 : i32
    %c0_i32_1 = arith.constant 0 : i32
    return %c0_i32, %c0_i32_0 : i32, i32
  }
  func.func @transform_7(%arg0: i32) -> (i32, i32) {
    %c0_i32 = arith.constant 0 : i32
    %c0_i32_0 = arith.constant 0 : i32
    %c0_i32_1 = arith.constant 0 : i32
    return %c0_i32, %c0_i32_0 : i32, i32
  }
  func.func @transform_8(%arg0: i32) -> i32 {
    %c0_i32 = arith.constant 0 : i32
    %c0_i32_0 = arith.constant 0 : i32
    return %c0_i32 : i32
  }
  func.func @transform_9(%arg0: i32) -> (i32, i32) {
    %c0_i32 = arith.constant 0 : i32
    %c0_i32_0 = arith.constant 0 : i32
    return %c0_i32, %arg0 : i32, i32
  }
}

</mosaic_0001>

<llo_original>
// kernel: mlp_forward.1
$region0: #{mlp_forward.1}
  #allocation0 [shape = 'u32[]', space=smem, size = 0x4, offset = 0x4, fixed_abs, tag = 'smem constant byte address 0x4 - core index']
  #allocation1 [shape = 'u32[144,128]{1,0:T(1,128)}', space=vmem, size = 0x12000, scoped, tag = 'internal scratch']
  #allocation2 [shape = 'f32[1]{0:T(128)S(6)}', space=smem, size = 0x200, scoped, tag = 'scoped memory for mlp_forward.1']
  %s0 = inlined_call_operand.vmem [shape: bf16[128,32], index: 0, kind: input, shape index: {}]
  %s1 = inlined_call_operand.vmem [shape: bf16[32,64], index: 1, kind: input, shape index: {}]
  %s2 = inlined_call_operand.vmem [shape: f32[1,64], index: 2, kind: input, shape index: {}]
  %s3 = inlined_call_operand.vmem [shape: bf16[64,64], index: 3, kind: input, shape index: {}]
  %s4 = inlined_call_operand.vmem [shape: f32[1,64], index: 4, kind: input, shape index: {}]
  %s5 = inlined_call_operand.vmem [shape: bf16[64,32], index: 5, kind: input, shape index: {}]
  %s6 = inlined_call_operand.vmem [shape: f32[1,32], index: 6, kind: input, shape index: {}]
  %s7 = inlined_call_operand.vmem [shape: bf16[1,32], index: 7, kind: input, shape index: {}]
  %s8 = inlined_call_operand.<no memory space> [shape: f32[1], index: 8, kind: input, shape index: {}]
  %s9 = inlined_call_operand.vmem [shape: f32[1,128], index: 9, kind: output, shape index: {}]
  %s10 = sld [smem:[#allocation0]]
  $region46: #{mlp_forward.1} parent=0
    _
  %s12 = ssub.s32 1, %s10
  %s13 = scalar_select 0, %s12, %s10
  %14 = sst [smem:[#allocation2]] %s8
  // Predicated region
  $region2: #{mlp_forward.1} parent=0 // pred_check
    _
  $region3: #{mlp_forward.1} parent=0 // pred_check_branch
    %16 = sbr.rel (0) target = $region5
  $region4: #{mlp_forward.1} parent=0 // pred_region
    _
  $region5: #{mlp_forward.1} parent=0 // pred_fallthru
    _
  // Predicated region
  $region6: #{mlp_forward.1} parent=0 // pred_check
    _
  $region7: #{mlp_forward.1} parent=0 // pred_check_branch
    %18 = sbr.rel (0) target = $region9
  $region8: #{mlp_forward.1} parent=0 // pred_region
    _
  $region9: #{mlp_forward.1} parent=0 // pred_fallthru
    _
  // Predicated region
  $region10: #{mlp_forward.1} parent=0 // pred_check
    _
  $region11: #{mlp_forward.1} parent=0 // pred_check_branch
    %20 = sbr.rel (0) target = $region13
  $region12: #{mlp_forward.1} parent=0 // pred_region
    _
  $region13: #{mlp_forward.1} parent=0 // pred_fallthru
    _
  // Predicated region
  $region14: #{mlp_forward.1} parent=0 // pred_check
    _
  $region15: #{mlp_forward.1} parent=0 // pred_check_branch
    %22 = sbr.rel (0) target = $region17
  $region16: #{mlp_forward.1} parent=0 // pred_region
    _
  $region17: #{mlp_forward.1} parent=0 // pred_fallthru
    _
  // Predicated region
  $region18: #{mlp_forward.1} parent=0 // pred_check
    _
  $region19: #{mlp_forward.1} parent=0 // pred_check_branch
    %24 = sbr.rel (0) target = $region21
  $region20: #{mlp_forward.1} parent=0 // pred_region
    _
  $region21: #{mlp_forward.1} parent=0 // pred_fallthru
    _
  // Predicated region
  $region22: #{mlp_forward.1} parent=0 // pred_check
    _
  $region23: #{mlp_forward.1} parent=0 // pred_check_branch
    %26 = sbr.rel (0) target = $region25
  $region24: #{mlp_forward.1} parent=0 // pred_region
    _
  $region25: #{mlp_forward.1} parent=0 // pred_fallthru
    _
  // Predicated region
  $region26: #{mlp_forward.1} parent=0 // pred_check
    _
  $region27: #{mlp_forward.1} parent=0 // pred_check_branch
    %28 = sbr.rel (0) target = $region29
  $region28: #{mlp_forward.1} parent=0 // pred_region
    _
  $region29: #{mlp_forward.1} parent=0 // pred_fallthru
    _
  // Predicated region
  $region30: #{mlp_forward.1} parent=0 // pred_check
    _
  $region31: #{mlp_forward.1} parent=0 // pred_check_branch
    %30 = sbr.rel (0) target = $region33
  $region32: #{mlp_forward.1} parent=0 // pred_region
    _
  $region33: #{mlp_forward.1} parent=0 // pred_fallthru
    _
  // Predicated region
  $region34: #{mlp_forward.1} parent=0 // pred_check
    _
  $region35: #{mlp_forward.1} parent=0 // pred_check_branch
    %32 = sbr.rel (0) target = $region37
  $region36: #{mlp_forward.1} parent=0 // pred_region
    _
  $region37: #{mlp_forward.1} parent=0 // pred_fallthru
    _
  %v34 = vld [vmem:[%s0] sm:$0xf]
  %v35 = vld [vmem:[%s0 + $0x4] sm:$0xf]
  %v36 = vld [vmem:[%s0 + $0x8] sm:$0xf]
  %v37 = vld [vmem:[%s0 + $0xc] sm:$0xf]
  %v38 = vld [vmem:[%s0 + $0x10] sm:$0xf]
  %v39 = vld [vmem:[%s0 + $0x14] sm:$0xf]
  %v40 = vld [vmem:[%s0 + $0x18] sm:$0xf]
  %v41 = vld [vmem:[%s0 + $0x1c] sm:$0xf]
  %v42 = vld [vmem:[%s0 + $0x20] sm:$0xf]
  %v43 = vld [vmem:[%s0 + $0x24] sm:$0xf]
  %v44 = vld [vmem:[%s0 + $0x28] sm:$0xf]
  %v45 = vld [vmem:[%s0 + $0x2c] sm:$0xf]
  %v46 = vld [vmem:[%s0 + $0x30] sm:$0xf]
  %v47 = vld [vmem:[%s0 + $0x34] sm:$0xf]
  %v48 = vld [vmem:[%s0 + $0x38] sm:$0xf]
  %v49 = vld [vmem:[%s0 + $0x3c] sm:$0xf]
  %v50 = vld [vmem:[%s1] sm:$0xf]
  %v51 = vld [vmem:[%s1 + $0x4] sm:$0xf]
  %v52 = vld [vmem:[%s1 + $0x8] sm:$0xf]
  %v53 = vld [vmem:[%s1 + $0xc] sm:$0xf]
  %v54 = vld [vmem:[%s2] sm:$0x1]
  %v56 = vlaneseq
  %v57 = vshrl.u32 %v56, 7
  %v58 = vsub.s32 0, %v57
  %v59 = vrot.slane %v54, %v58
  %v77 = vunpack.c.l.b16 %v34
  %v78 = vunpack.c.l.b16 %v35
  %v79 = vunpack.c.l.b16 %v36
  %v80 = vunpack.c.l.b16 %v37
  %v81 = vunpack.c.l.b16 %v38
  %v82 = vunpack.c.l.b16 %v39
  %v83 = vunpack.c.l.b16 %v40
  %v84 = vunpack.c.l.b16 %v41
  %v85 = vunpack.c.l.b16 %v42
  %v86 = vunpack.c.l.b16 %v43
  %v87 = vunpack.c.l.b16 %v44
  %v88 = vunpack.c.l.b16 %v45
  %v89 = vunpack.c.l.b16 %v46
  %v90 = vunpack.c.l.b16 %v47
  %v91 = vunpack.c.l.b16 %v48
  %v92 = vunpack.c.l.b16 %v49
  %v93 = vpack.c.b16 %v78, %v77
  %v94 = vpack.c.b16 %v80, %v79
  %v95 = vpack.c.b16 %v82, %v81
  %v96 = vpack.c.b16 %v84, %v83
  %v97 = vpack.c.b16 %v86, %v85
  %v98 = vpack.c.b16 %v88, %v87
  %v99 = vpack.c.b16 %v90, %v89
  %v100 = vpack.c.b16 %v92, %v91
  %v105 = vunpack.c.l.b16 %v50
  %v106 = vunpack.c.l.b16 %v51
  %v107 = vunpack.c.l.b16 %v52
  %v108 = vunpack.c.l.b16 %v53
  %v109 = vpack.c.b16 %v106, %v105
  %v110 = vpack.c.b16 %v108, %v107
  %vm113 = vcmask 261120
  %v115 = vsel %vm113, %v93, 0
  %v118 = vsel %vm113, %v94, 0
  %v121 = vsel %vm113, %v95, 0
  %v124 = vsel %vm113, %v96, 0
  %v127 = vsel %vm113, %v97, 0
  %v130 = vsel %vm113, %v98, 0
  %v133 = vsel %vm113, %v99, 0
  %v136 = vsel %vm113, %v100, 0
  %138 = vmatprep.subr.bf16.mxu0 0
  %139 = vmatpush1.bf16.msra.mxu0 0
  %140 = vmatprep.subr.bf16.mxu0 0
  %141 = vmatpush1.bf16.msra.mxu0 0
  %142 = vmatprep.subr.bf16.mxu0 0
  %143 = vmatpush1.bf16.msra.mxu0 0
  %144 = vmatprep.subr.bf16.mxu0 0
  %145 = vmatpush1.bf16.msra.mxu0 0
  %146 = vmatprep.subr.bf16.mxu0 0
  %147 = vmatpush1.bf16.msra.mxu0 0
  %148 = vmatprep.subr.bf16.mxu0 0
  %149 = vmatpush1.bf16.msra.mxu0 0
  %150 = vmatprep.subr.bf16.mxu0 0
  %151 = vmatpush1.bf16.msra.mxu0 %v110
  %152 = vmatprep.subr.bf16.mxu0 0
  %153 = vmatpush1.bf16.msra.mxu0 %v109
  %154 = vmatprep.subr.bf16.mxu0 0
  %155 = vmatpush2.bf16.msra.mxu0 0
  %156 = vmatprep.subr.bf16.mxu0 0
  %157 = vmatpush2.bf16.msra.mxu0 0
  %158 = vmatprep.subr.bf16.mxu0 0
  %159 = vmatpush2.bf16.msra.mxu0 0
  %160 = vmatprep.subr.bf16.mxu0 0
  %161 = vmatpush2.bf16.msra.mxu0 0
  %162 = vmatprep.subr.bf16.mxu0 0
  %163 = vmatpush2.bf16.msra.mxu0 0
  %164 = vmatprep.subr.bf16.mxu0 0
  %165 = vmatpush2.bf16.msra.mxu0 0
  %166 = vmatprep.subr.bf16.mxu0 0
  %167 = vmatpush2.bf16.msra.mxu0 0
  %168 = vmatprep.subr.bf16.mxu0 0
  %169 = vmatpush2.bf16.msra.mxu0 0
  %170 = vmatprep.mubr.bf16.mxu0 0
  %171 = vmatmul.mubr.bf16.gmra.mxu0 %v115
  %v172 = vpop.f32.mrf.mxu0
  %v173 = vadd.f32 %v59, %v172
  %v174 = vpop.f32.mrf.mxu0
  %v175 = vpop.f32.mrf.mxu0
  %v176 = vadd.f32 %v59, %v175
  %v177 = vpop.f32.mrf.mxu0
  %178 = vmatprep.mubr.bf16.mxu0 0
  %179 = vmatmul.mubr.bf16.gmra.mxu0 %v118
  %v180 = vpop.f32.mrf.mxu0
  %v181 = vadd.f32 %v59, %v180
  %v182 = vpop.f32.mrf.mxu0
  %v183 = vpop.f32.mrf.mxu0
  %v184 = vadd.f32 %v59, %v183
  %v185 = vpop.f32.mrf.mxu0
  %186 = vmatprep.mubr.bf16.mxu0 0
  %187 = vmatmul.mubr.bf16.gmra.mxu0 %v121
  %v188 = vpop.f32.mrf.mxu0
  %v189 = vadd.f32 %v59, %v188
  %v190 = vpop.f32.mrf.mxu0
  %v191 = vpop.f32.mrf.mxu0
  %v192 = vadd.f32 %v59, %v191
  %v193 = vpop.f32.mrf.mxu0
  %194 = vmatprep.mubr.bf16.mxu0 0
  %195 = vmatmul.mubr.bf16.gmra.mxu0 %v124
  %v196 = vpop.f32.mrf.mxu0
  %v197 = vadd.f32 %v59, %v196
  %v198 = vpop.f32.mrf.mxu0
  %v199 = vpop.f32.mrf.mxu0
  %v200 = vadd.f32 %v59, %v199
  %v201 = vpop.f32.mrf.mxu0
  %202 = vmatprep.mubr.bf16.mxu0 0
  %203 = vmatmul.mubr.bf16.gmra.mxu0 %v127
  %v204 = vpop.f32.mrf.mxu0
  %v205 = vadd.f32 %v59, %v204
  %v206 = vpop.f32.mrf.mxu0
  %v207 = vpop.f32.mrf.mxu0
  %v208 = vadd.f32 %v59, %v207
  %v209 = vpop.f32.mrf.mxu0
  %210 = vmatprep.mubr.bf16.mxu0 0
  %211 = vmatmul.mubr.bf16.gmra.mxu0 %v130
  %v212 = vpop.f32.mrf.mxu0
  %v213 = vadd.f32 %v59, %v212
  %v214 = vpop.f32.mrf.mxu0
  %v215 = vpop.f32.mrf.mxu0
  %v216 = vadd.f32 %v59, %v215
  %v217 = vpop.f32.mrf.mxu0
  %218 = vmatprep.mubr.bf16.mxu0 0
  %219 = vmatmul.mubr.bf16.gmra.mxu0 %v133
  %v220 = vpop.f32.mrf.mxu0
  %v221 = vadd.f32 %v59, %v220
  %v222 = vpop.f32.mrf.mxu0
  %v223 = vpop.f32.mrf.mxu0
  %v224 = vadd.f32 %v59, %v223
  %v225 = vpop.f32.mrf.mxu0
  %226 = vmatprep.mubr.bf16.mxu0 0
  %227 = vmatmul.mubr.bf16.gmra.mxu0 %v136
  %v228 = vpop.f32.mrf.mxu0
  %v229 = vadd.f32 %v59, %v228
  %v230 = vpop.f32.mrf.mxu0
  %v231 = vpop.f32.mrf.mxu0
  %v232 = vadd.f32 %v59, %v231
  %v233 = vpop.f32.mrf.mxu0
  %234 = vdwg.mxu0
  %v235 = vmax.f32 %v173, 0.0
  %v236 = vmax.f32 %v176, 0.0
  %v237 = vmax.f32 %v181, 0.0
  %v238 = vmax.f32 %v184, 0.0
  %v239 = vmax.f32 %v189, 0.0
  %v240 = vmax.f32 %v192, 0.0
  %v241 = vmax.f32 %v197, 0.0
  %v242 = vmax.f32 %v200, 0.0
  %v243 = vmax.f32 %v205, 0.0
  %v244 = vmax.f32 %v208, 0.0
  %v245 = vmax.f32 %v213, 0.0
  %v246 = vmax.f32 %v216, 0.0
  %v247 = vmax.f32 %v221, 0.0
  %v248 = vmax.f32 %v224, 0.0
  %v249 = vmax.f32 %v229, 0.0
  %v250 = vmax.f32 %v232, 0.0
  %v251 = vpack.c.bf16 %v236, %v235
  %v252 = vpack.c.bf16 %v238, %v237
  %v253 = vpack.c.bf16 %v240, %v239
  %v254 = vpack.c.bf16 %v242, %v241
  %v255 = vpack.c.bf16 %v244, %v243
  %v256 = vpack.c.bf16 %v246, %v245
  %v257 = vpack.c.bf16 %v248, %v247
  %v258 = vpack.c.bf16 %v250, %v249
  %v259 = vld [vmem:[%s3] sm:$0xf]
  %v260 = vld [vmem:[%s3 + $0x4] sm:$0xf]
  %v261 = vld [vmem:[%s3 + $0x8] sm:$0xf]
  %v262 = vld [vmem:[%s3 + $0xc] sm:$0xf]
  %v263 = vld [vmem:[%s3 + $0x10] sm:$0xf]
  %v264 = vld [vmem:[%s3 + $0x14] sm:$0xf]
  %v265 = vld [vmem:[%s3 + $0x18] sm:$0xf]
  %v266 = vld [vmem:[%s3 + $0x1c] sm:$0xf]
  %v267 = vld [vmem:[%s4] sm:$0x1]
  %v269 = vlaneseq
  %v270 = vshrl.u32 %v269, 7
  %v271 = vsub.s32 0, %v270
  %v272 = vrot.slane %v267, %v271
  %v282 = vunpack.c.l.b16 %v259
  %v283 = vunpack.c.l.b16 %v260
  %v284 = vunpack.c.l.b16 %v261
  %v285 = vunpack.c.l.b16 %v262
  %v286 = vunpack.c.l.b16 %v263
  %v287 = vunpack.c.l.b16 %v264
  %v288 = vunpack.c.l.b16 %v265
  %v289 = vunpack.c.l.b16 %v266
  %v290 = vpack.c.b16 %v283, %v282
  %v291 = vpack.c.b16 %v285, %v284
  %v292 = vpack.c.b16 %v287, %v286
  %v293 = vpack.c.b16 %v289, %v288
  %vm298 = vcmask 523264
  %v300 = vsel %vm298, %v251, 0
  %v303 = vsel %vm298, %v252, 0
  %v306 = vsel %vm298, %v253, 0
  %v309 = vsel %vm298, %v254, 0
  %v312 = vsel %vm298, %v255, 0
  %v315 = vsel %vm298, %v256, 0
  %v318 = vsel %vm298, %v257, 0
  %v321 = vsel %vm298, %v258, 0
  %323 = vmatprep.subr.bf16.mxu0 0
  %324 = vmatpush1.bf16.msra.mxu0 0
  %325 = vmatprep.subr.bf16.mxu0 0
  %326 = vmatpush1.bf16.msra.mxu0 0
  %327 = vmatprep.subr.bf16.mxu0 0
  %328 = vmatpush1.bf16.msra.mxu0 0
  %329 = vmatprep.subr.bf16.mxu0 0
  %330 = vmatpush1.bf16.msra.mxu0 0
  %331 = vmatprep.subr.bf16.mxu0 0
  %332 = vmatpush1.bf16.msra.mxu0 %v293
  %333 = vmatprep.subr.bf16.mxu0 0
  %334 = vmatpush1.bf16.msra.mxu0 %v292
  %335 = vmatprep.subr.bf16.mxu0 0
  %336 = vmatpush1.bf16.msra.mxu0 %v291
  %337 = vmatprep.subr.bf16.mxu0 0
  %338 = vmatpush1.bf16.msra.mxu0 %v290
  %339 = vmatprep.subr.bf16.mxu0 0
  %340 = vmatpush2.bf16.msra.mxu0 0
  %341 = vmatprep.subr.bf16.mxu0 0
  %342 = vmatpush2.bf16.msra.mxu0 0
  %343 = vmatprep.subr.bf16.mxu0 0
  %344 = vmatpush2.bf16.msra.mxu0 0
  %345 = vmatprep.subr.bf16.mxu0 0
  %346 = vmatpush2.bf16.msra.mxu0 0
  %347 = vmatprep.subr.bf16.mxu0 0
  %348 = vmatpush2.bf16.msra.mxu0 0
  %349 = vmatprep.subr.bf16.mxu0 0
  %350 = vmatpush2.bf16.msra.mxu0 0
  %351 = vmatprep.subr.bf16.mxu0 0
  %352 = vmatpush2.bf16.msra.mxu0 0
  %353 = vmatprep.subr.bf16.mxu0 0
  %354 = vmatpush2.bf16.msra.mxu0 0
  %355 = vmatprep.mubr.bf16.mxu0 0
  %356 = vmatmul.mubr.bf16.gmra.mxu0 %v300
  %v357 = vpop.f32.mrf.mxu0
  %v358 = vadd.f32 %v272, %v357
  %v359 = vpop.f32.mrf.mxu0
  %v360 = vpop.f32.mrf.mxu0
  %v361 = vadd.f32 %v272, %v360
  %v362 = vpop.f32.mrf.mxu0
  %363 = vmatprep.mubr.bf16.mxu0 0
  %364 = vmatmul.mubr.bf16.gmra.mxu0 %v303
  %v365 = vpop.f32.mrf.mxu0
  %v366 = vadd.f32 %v272, %v365
  %v367 = vpop.f32.mrf.mxu0
  %v368 = vpop.f32.mrf.mxu0
  %v369 = vadd.f32 %v272, %v368
  %v370 = vpop.f32.mrf.mxu0
  %371 = vmatprep.mubr.bf16.mxu0 0
  %372 = vmatmul.mubr.bf16.gmra.mxu0 %v306
  %v373 = vpop.f32.mrf.mxu0
  %v374 = vadd.f32 %v272, %v373
  %v375 = vpop.f32.mrf.mxu0
  %v376 = vpop.f32.mrf.mxu0
  %v377 = vadd.f32 %v272, %v376
  %v378 = vpop.f32.mrf.mxu0
  %379 = vmatprep.mubr.bf16.mxu0 0
  %380 = vmatmul.mubr.bf16.gmra.mxu0 %v309
  %v381 = vpop.f32.mrf.mxu0
  %v382 = vadd.f32 %v272, %v381
  %v383 = vpop.f32.mrf.mxu0
  %v384 = vpop.f32.mrf.mxu0
  %v385 = vadd.f32 %v272, %v384
  %v386 = vpop.f32.mrf.mxu0
  %387 = vmatprep.mubr.bf16.mxu0 0
  %388 = vmatmul.mubr.bf16.gmra.mxu0 %v312
  %v389 = vpop.f32.mrf.mxu0
  %v390 = vadd.f32 %v272, %v389
  %v391 = vpop.f32.mrf.mxu0
  %v392 = vpop.f32.mrf.mxu0
  %v393 = vadd.f32 %v272, %v392
  %v394 = vpop.f32.mrf.mxu0
  %395 = vmatprep.mubr.bf16.mxu0 0
  %396 = vmatmul.mubr.bf16.gmra.mxu0 %v315
  %v397 = vpop.f32.mrf.mxu0
  %v398 = vadd.f32 %v272, %v397
  %v399 = vpop.f32.mrf.mxu0
  %v400 = vpop.f32.mrf.mxu0
  %v401 = vadd.f32 %v272, %v400
  %v402 = vpop.f32.mrf.mxu0
  %403 = vmatprep.mubr.bf16.mxu0 0
  %404 = vmatmul.mubr.bf16.gmra.mxu0 %v318
  %v405 = vpop.f32.mrf.mxu0
  %v406 = vadd.f32 %v272, %v405
  %v407 = vpop.f32.mrf.mxu0
  %v408 = vpop.f32.mrf.mxu0
  %v409 = vadd.f32 %v272, %v408
  %v410 = vpop.f32.mrf.mxu0
  %411 = vmatprep.mubr.bf16.mxu0 0
  %412 = vmatmul.mubr.bf16.gmra.mxu0 %v321
  %v413 = vpop.f32.mrf.mxu0
  %v414 = vadd.f32 %v272, %v413
  %v415 = vpop.f32.mrf.mxu0
  %v416 = vpop.f32.mrf.mxu0
  %v417 = vadd.f32 %v272, %v416
  %v418 = vpop.f32.mrf.mxu0
  %419 = vdwg.mxu0
  %v420 = vmax.f32 %v358, 0.0
  %v421 = vmax.f32 %v361, 0.0
  %v422 = vmax.f32 %v366, 0.0
  %v423 = vmax.f32 %v369, 0.0
  %v424 = vmax.f32 %v374, 0.0
  %v425 = vmax.f32 %v377, 0.0
  %v426 = vmax.f32 %v382, 0.0
  %v427 = vmax.f32 %v385, 0.0
  %v428 = vmax.f32 %v390, 0.0
  %v429 = vmax.f32 %v393, 0.0
  %v430 = vmax.f32 %v398, 0.0
  %v431 = vmax.f32 %v401, 0.0
  %v432 = vmax.f32 %v406, 0.0
  %v433 = vmax.f32 %v409, 0.0
  %v434 = vmax.f32 %v414, 0.0
  %v435 = vmax.f32 %v417, 0.0
  %v436 = vpack.c.bf16 %v421, %v420
  %v437 = vpack.c.bf16 %v423, %v422
  %v438 = vpack.c.bf16 %v425, %v424
  %v439 = vpack.c.bf16 %v427, %v426
  %v440 = vpack.c.bf16 %v429, %v428
  %v441 = vpack.c.bf16 %v431, %v430
  %v442 = vpack.c.bf16 %v433, %v432
  %v443 = vpack.c.bf16 %v435, %v434
  %v444 = vld [vmem:[%s5] sm:$0xf]
  %v445 = vld [vmem:[%s5 + $0x4] sm:$0xf]
  %v446 = vld [vmem:[%s5 + $0x8] sm:$0xf]
  %v447 = vld [vmem:[%s5 + $0xc] sm:$0xf]
  %v448 = vld [vmem:[%s5 + $0x10] sm:$0xf]
  %v449 = vld [vmem:[%s5 + $0x14] sm:$0xf]
  %v450 = vld [vmem:[%s5 + $0x18] sm:$0xf]
  %v451 = vld [vmem:[%s5 + $0x1c] sm:$0xf]
  %v452 = vld [vmem:[%s6] sm:$0x1]
  %v454 = vlaneseq
  %v455 = vshrl.u32 %v454, 7
  %v456 = vsub.s32 0, %v455
  %v457 = vrot.slane %v452, %v456
  %v467 = vunpack.c.l.b16 %v444
  %v468 = vunpack.c.l.b16 %v445
  %v469 = vunpack.c.l.b16 %v446
  %v470 = vunpack.c.l.b16 %v447
  %v471 = vunpack.c.l.b16 %v448
  %v472 = vunpack.c.l.b16 %v449
  %v473 = vunpack.c.l.b16 %v450
  %v474 = vunpack.c.l.b16 %v451
  %v475 = vpack.c.b16 %v468, %v467
  %v476 = vpack.c.b16 %v470, %v469
  %v477 = vpack.c.b16 %v472, %v471
  %v478 = vpack.c.b16 %v474, %v473
  %v484 = vsel %vm298, %v436, 0
  %v487 = vsel %vm298, %v437, 0
  %v490 = vsel %vm298, %v438, 0
  %v493 = vsel %vm298, %v439, 0
  %v496 = vsel %vm298, %v440, 0
  %v499 = vsel %vm298, %v441, 0
  %v502 = vsel %vm298, %v442, 0
  %v505 = vsel %vm298, %v443, 0
  %507 = vmatprep.subr.bf16.mxu0 0
  %508 = vmatpush1.bf16.msra.mxu0 0
  %509 = vmatprep.subr.bf16.mxu0 0
  %510 = vmatpush1.bf16.msra.mxu0 0
  %511 = vmatprep.subr.bf16.mxu0 0
  %512 = vmatpush1.bf16.msra.mxu0 0
  %513 = vmatprep.subr.bf16.mxu0 0
  %514 = vmatpush1.bf16.msra.mxu0 0
  %515 = vmatprep.subr.bf16.mxu0 0
  %516 = vmatpush1.bf16.msra.mxu0 %v478
  %517 = vmatprep.subr.bf16.mxu0 0
  %518 = vmatpush1.bf16.msra.mxu0 %v477
  %519 = vmatprep.subr.bf16.mxu0 0
  %520 = vmatpush1.bf16.msra.mxu0 %v476
  %521 = vmatprep.subr.bf16.mxu0 0
  %522 = vmatpush1.bf16.msra.mxu0 %v475
  %523 = vmatprep.subr.bf16.mxu0 0
  %524 = vmatpush2.bf16.msra.mxu0 0
  %525 = vmatprep.subr.bf16.mxu0 0
  %526 = vmatpush2.bf16.msra.mxu0 0
  %527 = vmatprep.subr.bf16.mxu0 0
  %528 = vmatpush2.bf16.msra.mxu0 0
  %529 = vmatprep.subr.bf16.mxu0 0
  %530 = vmatpush2.bf16.msra.mxu0 0
  %531 = vmatprep.subr.bf16.mxu0 0
  %532 = vmatpush2.bf16.msra.mxu0 0
  %533 = vmatprep.subr.bf16.mxu0 0
  %534 = vmatpush2.bf16.msra.mxu0 0
  %535 = vmatprep.subr.bf16.mxu0 0
  %536 = vmatpush2.bf16.msra.mxu0 0
  %537 = vmatprep.subr.bf16.mxu0 0
  %538 = vmatpush2.bf16.msra.mxu0 0
  %539 = vmatprep.mubr.bf16.mxu0 0
  %540 = vmatmul.mubr.bf16.gmra.mxu0 %v484
  %v541 = vpop.f32.mrf.mxu0
  %v542 = vadd.f32 %v457, %v541
  %v543 = vpop.f32.mrf.mxu0
  %v544 = vpop.f32.mrf.mxu0
  %v545 = vadd.f32 %v457, %v544
  %v546 = vpop.f32.mrf.mxu0
  %547 = vmatprep.mubr.bf16.mxu0 0
  %548 = vmatmul.mubr.bf16.gmra.mxu0 %v487
  %v549 = vpop.f32.mrf.mxu0
  %v550 = vadd.f32 %v457, %v549
  %v551 = vpop.f32.mrf.mxu0
  %v552 = vpop.f32.mrf.mxu0
  %v553 = vadd.f32 %v457, %v552
  %v554 = vpop.f32.mrf.mxu0
  %555 = vmatprep.mubr.bf16.mxu0 0
  %556 = vmatmul.mubr.bf16.gmra.mxu0 %v490
  %v557 = vpop.f32.mrf.mxu0
  %v558 = vadd.f32 %v457, %v557
  %v559 = vpop.f32.mrf.mxu0
  %v560 = vpop.f32.mrf.mxu0
  %v561 = vadd.f32 %v457, %v560
  %v562 = vpop.f32.mrf.mxu0
  %563 = vmatprep.mubr.bf16.mxu0 0
  %564 = vmatmul.mubr.bf16.gmra.mxu0 %v493
  %v565 = vpop.f32.mrf.mxu0
  %v566 = vadd.f32 %v457, %v565
  %v567 = vpop.f32.mrf.mxu0
  %v568 = vpop.f32.mrf.mxu0
  %v569 = vadd.f32 %v457, %v568
  %v570 = vpop.f32.mrf.mxu0
  %571 = vmatprep.mubr.bf16.mxu0 0
  %572 = vmatmul.mubr.bf16.gmra.mxu0 %v496
  %v573 = vpop.f32.mrf.mxu0
  %v574 = vadd.f32 %v457, %v573
  %v575 = vpop.f32.mrf.mxu0
  %v576 = vpop.f32.mrf.mxu0
  %v577 = vadd.f32 %v457, %v576
  %v578 = vpop.f32.mrf.mxu0
  %579 = vmatprep.mubr.bf16.mxu0 0
  %580 = vmatmul.mubr.bf16.gmra.mxu0 %v499
  %v581 = vpop.f32.mrf.mxu0
  %v582 = vadd.f32 %v457, %v581
  %v583 = vpop.f32.mrf.mxu0
  %v584 = vpop.f32.mrf.mxu0
  %v585 = vadd.f32 %v457, %v584
  %v586 = vpop.f32.mrf.mxu0
  %587 = vmatprep.mubr.bf16.mxu0 0
  %588 = vmatmul.mubr.bf16.gmra.mxu0 %v502
  %v589 = vpop.f32.mrf.mxu0
  %v590 = vadd.f32 %v457, %v589
  %v591 = vpop.f32.mrf.mxu0
  %v592 = vpop.f32.mrf.mxu0
  %v593 = vadd.f32 %v457, %v592
  %v594 = vpop.f32.mrf.mxu0
  %595 = vmatprep.mubr.bf16.mxu0 0
  %596 = vmatmul.mubr.bf16.gmra.mxu0 %v505
  %v597 = vpop.f32.mrf.mxu0
  %v598 = vadd.f32 %v457, %v597
  %v599 = vpop.f32.mrf.mxu0
  %v600 = vpop.f32.mrf.mxu0
  %v601 = vadd.f32 %v457, %v600
  %v602 = vpop.f32.mrf.mxu0
  %603 = vdwg.mxu0
  %v604 = vmax.f32 %v542, 0.0
  %v605 = vmax.f32 %v545, 0.0
  %v606 = vmax.f32 %v550, 0.0
  %v607 = vmax.f32 %v553, 0.0
  %v608 = vmax.f32 %v558, 0.0
  %v609 = vmax.f32 %v561, 0.0
  %v610 = vmax.f32 %v566, 0.0
  %v611 = vmax.f32 %v569, 0.0
  %v612 = vmax.f32 %v574, 0.0
  %v613 = vmax.f32 %v577, 0.0
  %v614 = vmax.f32 %v582, 0.0
  %v615 = vmax.f32 %v585, 0.0
  %v616 = vmax.f32 %v590, 0.0
  %v617 = vmax.f32 %v593, 0.0
  %v618 = vmax.f32 %v598, 0.0
  %v619 = vmax.f32 %v601, 0.0
  %v620 = vld [vmem:[%s7] sm:$0x1]
  %v621 = vpack.c.bf16 %v605, %v604
  %v622 = vpack.c.bf16 %v607, %v606
  %v623 = vpack.c.bf16 %v609, %v608
  %v624 = vpack.c.bf16 %v611, %v610
  %v625 = vpack.c.bf16 %v613, %v612
  %v626 = vpack.c.bf16 %v615, %v614
  %v627 = vpack.c.bf16 %v617, %v616
  %v628 = vpack.c.bf16 %v619, %v618
  %s629 = sld [smem:[#allocation2]]
  %v630 = vstv %s629
  %v632 = vsel %vm113, %v620, 0
  %v635 = vsel %vm113, %v621, 0
  %v638 = vsel %vm113, %v622, 0
  %v641 = vsel %vm113, %v623, 0
  %v644 = vsel %vm113, %v624, 0
  %v647 = vsel %vm113, %v625, 0
  %v650 = vsel %vm113, %v626, 0
  %v653 = vsel %vm113, %v627, 0
  %v656 = vsel %vm113, %v628, 0
  %658 = vmatprep.subr.bf16.mxu0 0
  %659 = vmatpush1.bf16.xpose.msra.mxu0 %v656
  %660 = vmatprep.subr.bf16.mxu0 0
  %661 = vmatpush1.bf16.xpose.msra.mxu0 %v653
  %662 = vmatprep.subr.bf16.mxu0 0
  %663 = vmatpush1.bf16.xpose.msra.mxu0 %v650
  %664 = vmatprep.subr.bf16.mxu0 0
  %665 = vmatpush1.bf16.xpose.msra.mxu0 %v647
  %666 = vmatprep.subr.bf16.mxu0 0
  %667 = vmatpush1.bf16.xpose.msra.mxu0 %v644
  %668 = vmatprep.subr.bf16.mxu0 0
  %669 = vmatpush1.bf16.xpose.msra.mxu0 %v641
  %670 = vmatprep.subr.bf16.mxu0 0
  %671 = vmatpush1.bf16.xpose.msra.mxu0 %v638
  %672 = vmatprep.subr.bf16.mxu0 0
  %673 = vmatpush1.bf16.xpose.msra.mxu0 %v635
  %674 = vmatprep.subr.bf16.mxu0 0
  %675 = vmatpush2.bf16.xpose.msra.mxu0 0
  %676 = vmatprep.subr.bf16.mxu0 0
  %677 = vmatpush2.bf16.xpose.msra.mxu0 0
  %678 = vmatprep.subr.bf16.mxu0 0
  %679 = vmatpush2.bf16.xpose.msra.mxu0 0
  %680 = vmatprep.subr.bf16.mxu0 0
  %681 = vmatpush2.bf16.xpose.msra.mxu0 0
  %682 = vmatprep.subr.bf16.mxu0 0
  %683 = vmatpush2.bf16.xpose.msra.mxu0 0
  %684 = vmatprep.subr.bf16.mxu0 0
  %685 = vmatpush2.bf16.xpose.msra.mxu0 0
  %686 = vmatprep.subr.bf16.mxu0 0
  %687 = vmatpush2.bf16.xpose.msra.mxu0 0
  %688 = vmatprep.subr.bf16.mxu0 0
  %689 = vmatpush2.bf16.xpose.msra.mxu0 0
  %690 = vmatprep.mubr.bf16.mxu0 0
  %691 = vmatmul.mubr.bf16.gmra.mxu0 %v632
  %v692 = vpop.f32.mrf.mxu0
  %v693 = vadd.f32 %v630, %v692
  %v694 = vpop.f32.mrf.mxu0
  %v695 = vpop.f32.mrf.mxu0
  %v696 = vpop.f32.mrf.mxu0
  %697 = vdwg.mxu0
  %698 = vst [vmem:[%s9] sm:$0x1] %v693
  // Predicated region
  $region38: #{mlp_forward.1} parent=0 // pred_check
    _
  $region39: #{mlp_forward.1} parent=0 // pred_check_branch
    %700 = sbr.rel (0) target = $region41
  $region40: #{mlp_forward.1} parent=0 // pred_region
    _
  $region41: #{mlp_forward.1} parent=0 // pred_fallthru
    _
  // Predicated region
  $region42: #{mlp_forward.1} parent=0 // pred_check
    _
  $region43: #{mlp_forward.1} parent=0 // pred_check_branch
    %702 = sbr.rel (0) target = $region45
  $region44: #{mlp_forward.1} parent=0 // pred_region
    _
  $region45: #{mlp_forward.1} parent=0 // pred_fallthru
    _

</llo_original>
